<compile_context>
chip_gen: v7x
topology: tpu7x:2x2x1
jax: 0.10.0
libtpu: 0.0.40
codegen_flags: <defaults>
</compile_context>

<pallas_src>
import functools
import math

import jax
import jax.numpy as jnp
from jax.experimental import pallas as pl
from jax.experimental.pallas import tpu as pltpu

_K = 3          # kernel_size (3x3, padding='same', zero padding)
_BN_EPS = 1e-5  # nn.BatchNorm2d default eps
_LANE = 128
_SUBLANE = 8
_HALO = 128     # lane-aligned zero halo used for in-kernel im2col (>= W + 1)


# --------------------------- Pallas kernel -----------------------------------

def _res_block_kernel(x_ref, w1_ref, b1_ref, w2r_ref, b2_ref, out_ref, *, H, W):
    """One Conv2DResBlock on one batch element, entirely in VMEM.

    Layout: channels on the sublane axis, flattened H*W on the lane axis.
    Each 3x3 'same' conv = build the im2col patch matrix in-kernel from 9
    statically shifted views of a zero-haloed copy, then one MXU matmul.
    conv2(+BN2) and res_conv are one merged contraction; BN is pre-folded
    into the weights/biases by the wrapper.
    """
    HW = H * W
    f32 = jnp.float32

    x = x_ref[0].astype(f32)                               # (cin_p, HW)

    # Column index of every flattened pixel (for masking row-wrap taps).
    col = jax.lax.broadcasted_iota(jnp.int32, (1, HW), 1) % W

    def pad_halo(a):
        # (C, HW) -> (C, HW + 2*_HALO) with lane-aligned zero halo.
        z = jnp.zeros((a.shape[0], _HALO), f32)
        return jnp.concatenate([z, a, z], axis=1)

    def im2col(ap):
        """ap: zero-haloed (C, HW + 2*_HALO) -> patch matrix (9*C, HW)."""
        pieces = []
        for dh in (-1, 0, 1):          # kh - 1
            for dw in (-1, 0, 1):      # kw - 1
                off = _HALO + dh * W + dw
                v = ap[:, off:off + HW]
                # Out-of-range rows land in the zero halo automatically; only
                # the column wrap (reads from the adjacent row) needs masking.
                if dw == -1:
                    v = jnp.where(col > 0, v, 0.0)
                elif dw == 1:
                    v = jnp.where(col < W - 1, v, 0.0)
                pieces.append(v)
        return jnp.concatenate(pieces, axis=0)

    xp = pad_halo(x)

    # conv1 + folded BN1 + ReLU  (intermediate h never goes to HBM)
    h = jnp.dot(w1_ref[...], im2col(xp), preferred_element_type=f32)
    h = jnp.maximum(h + b1_ref[...], 0.0)                  # (cout_p, HW)

    # conv2 + folded BN2, res_conv, biases, add, ReLU -- one merged contraction
    cols2 = im2col(jnp.concatenate([pad_halo(h), xp], axis=0))
    y = jnp.dot(w2r_ref[...], cols2, preferred_element_type=f32)
    y = jnp.maximum(y + b2_ref[...], 0.0)

    out_ref[0] = y.astype(out_ref.dtype)


# --------------------------- block / net wrappers -----------------------------

def conv2d_res_block(x, blk, H, W):
    """x: (B, cin_p, H*W) channels-major bf16 activations. One fused call."""
    B, cin_p, HW = x.shape
    cout_p = blk["cout_p"]
    return pl.pallas_call(
        functools.partial(_res_block_kernel, H=H, W=W),
        out_shape=jax.ShapeDtypeStruct((B, cout_p, HW), x.dtype),
        grid=(B,),
        in_specs=[
            pl.BlockSpec((1, cin_p, HW), lambda b: (b, 0, 0)),
            pl.BlockSpec((cout_p, _K * _K * cin_p), lambda b: (0, 0)),
            pl.BlockSpec((cout_p, 1), lambda b: (0, 0)),
            pl.BlockSpec((cout_p, _K * _K * (cout_p + cin_p)), lambda b: (0, 0)),
            pl.BlockSpec((cout_p, 1), lambda b: (0, 0)),
        ],
        out_specs=pl.BlockSpec((1, cout_p, HW), lambda b: (b, 0, 0)),
        compiler_params=pltpu.CompilerParams(
            dimension_semantics=("parallel",),
            vmem_limit_bytes=32 * 1024 * 1024),   # well within 64 MiB v7x VMEM
    )(x, blk["W1"], blk["B1"], blk["W2R"], blk["B2"])


def conv2d_resnet(x_nchw, packed_blocks, H, W):
    """Forward pass of Conv2DResnet (preprocessing=None, mlp=None)."""
    B, C, _, _ = x_nchw.shape
    HW = H * W
    assert HW % _LANE == 0, "flattened spatial dim must be lane aligned"
    assert W + 1 <= _HALO
    cin_p = packed_blocks[0]["cin_p"]
    # NCHW -> channels-major (B, C, H*W): lane dim = H*W (lane-dense stores).
    x = x_nchw.reshape(B, C, HW)
    x = jnp.pad(x, ((0, 0), (0, cin_p - C), (0, 0)))   # pad Cin to sublane mult
    x = x.astype(jnp.bfloat16)                         # bf16 activations in HBM
    for blk in packed_blocks:
        x = conv2d_res_block(x, blk, H, W)
    cout = packed_blocks[-1]["cout"]
    return x[:, :cout, :].astype(jnp.float32).reshape(B, cout, H, W)


# --------------------------- parameters --------------------------------------

def _round_up(n, m):
    return ((n + m - 1) // m) * m


def _init_conv_raw(key, cin, cout):
    kw, kb = jax.random.split(key)
    bound = 1.0 / math.sqrt(cin * _K * _K)
    w = jax.random.uniform(kw, (cout, cin, _K, _K), jnp.float32, -bound, bound)
    b = jax.random.uniform(kb, (cout,), jnp.float32, -bound, bound)
    return w, b


def init_block_params(key, cin, cout):
    """Raw OIHW conv params with eval-mode BatchNorm folded into them."""
    k1, k2, k3 = jax.random.split(key, 3)
    w1, b1 = _init_conv_raw(k1, cin, cout)
    w2, b2 = _init_conv_raw(k2, cout, cout)
    wr, br = _init_conv_raw(k3, cin, cout)
    s = 1.0 / math.sqrt(1.0 + _BN_EPS)   # gamma=1, beta=0, mean=0, var=1
    return dict(cin=cin, cout=cout,
                w1f=w1 * s, b1f=b1 * s,   # conv1 folded with norm1
                w2f=w2 * s, wr=wr,        # conv2 folded with norm2 | res_conv
                b2m=b2 * s + br)          # merged bias of both paths


def init_resnet_params(key, in_channels, filters):
    blocks = []
    cin = in_channels
    for i, f in enumerate(filters):
        blocks.append(init_block_params(jax.random.fold_in(key, i), cin, f))
        cin = f
    return blocks


def pack_block_params(p):
    """Pad channels to sublane multiples and flatten the 3x3 taps into the
    contraction dim (kh-major, kw-minor, then input channel -- must match
    _res_block_kernel.im2col)."""
    cin, cout = p["cin"], p["cout"]
    cin_p, cout_p = _round_up(cin, _SUBLANE), _round_up(cout, _SUBLANE)

    def pad_oihw(w, co_p, ci_p):
        return jnp.pad(w, ((0, co_p - w.shape[0]), (0, ci_p - w.shape[1]),
                           (0, 0), (0, 0)))

    w1p = pad_oihw(p["w1f"], cout_p, cin_p)
    w2p = pad_oihw(p["w2f"], cout_p, cout_p)
    wrp = pad_oihw(p["wr"], cout_p, cin_p)
    wcat = jnp.concatenate([w2p, wrp], axis=1)     # contraction: [h | x] channels

    W1 = jnp.transpose(w1p, (0, 2, 3, 1)).reshape(cout_p, _K * _K * cin_p)
    W2R = jnp.transpose(wcat, (0, 2, 3, 1)).reshape(
        cout_p, _K * _K * (cout_p + cin_p))
    B1 = jnp.pad(p["b1f"], (0, cout_p - cout)).reshape(cout_p, 1)
    B2 = jnp.pad(p["b2m"], (0, cout_p - cout)).reshape(cout_p, 1)
    return dict(W1=W1, B1=B1, W2R=W2R, B2=B2,
                cin=cin, cout=cout, cin_p=cin_p, cout_p=cout_p)


# --------------------------- pure-JAX reference -------------------------------

def _ref_conv(x, w):
    return jax.lax.conv_general_dilated(
        x, w, window_strides=(1, 1), padding="SAME",
        dimension_numbers=("NCHW", "OIHW", "NCHW"),
        precision=jax.lax.Precision.HIGHEST)


def reference_forward(x_nchw, folded_blocks):
    """lax.conv reference with the same folded params and the same bf16
    activation storage between blocks as the Pallas pipeline."""
    x = x_nchw.astype(jnp.bfloat16).astype(jnp.float32)
    for p in folded_blocks:
        h = jnp.maximum(_ref_conv(x, p["w1f"]) + p["b1f"][None, :, None, None],
                        0.0)
        y = (_ref_conv(h, p["w2f"]) + _ref_conv(x, p["wr"])
             + p["b2m"][None, :, None, None])
        x = jnp.maximum(y, 0.0).astype(jnp.bfloat16).astype(jnp.float32)
    return x


# --------------------------- main ---------------------------------------------

if __name__ == "__main__":
    key = jax.random.PRNGKey(0)
    kx, kp = jax.random.split(key)

    batch, in_channels, hw = 2, 4, 16
    filters = [8, 8]

    x = jax.random.normal(kx, (batch, in_channels, hw, hw), jnp.float32)
    folded = init_resnet_params(kp, in_channels, filters)
    packed = [pack_block_params(p) for p in folded]

    fwd = jax.jit(lambda inp: conv2d_resnet(inp, packed, hw, hw))
    out = fwd(x)
    jax.block_until_ready(out)

    assert out.shape == (batch, filters[-1], hw, hw), out.shape
    assert bool(jnp.all(jnp.isfinite(out)))

    ref = reference_forward(x, folded)
    err = float(jnp.max(jnp.abs(out - ref)))
    assert err < 5e-2, f"max abs error vs lax.conv reference: {err}"
    print("KERNEL_OK")
</pallas_src>

<mosaic_0001>
module attributes {stable_mosaic.version = 11 : i64} {
  func.func @_res_block_kernel(%arg0: i32, %arg1: memref<1x8x256xbf16, #tpu.memory_space<vmem>>, %arg2: memref<8x72xf32, #tpu.memory_space<vmem>>, %arg3: memref<8x1xf32, #tpu.memory_space<vmem>>, %arg4: memref<8x144xf32, #tpu.memory_space<vmem>>, %arg5: memref<8x1xf32, #tpu.memory_space<vmem>>, %arg6: memref<1x8x256xbf16, #tpu.memory_space<vmem>>) attributes {dimension_semantics = [#tpu.dimension_semantics<parallel>], iteration_bounds = array<i64: 2>, scalar_prefetch = 0 : i64, scratch_operands = 0 : i64, tpu.core_type = #tpu.core_type<tc>, window_params = [{transform_indices = @transform_0, window_bounds = array<i64: 1, 8, 256>}, {pipeline_mode = #tpu.pipeline_mode<synchronous>, transform_indices = @transform_1, window_bounds = array<i64: 8, 72>}, {pipeline_mode = #tpu.pipeline_mode<synchronous>, transform_indices = @transform_2, window_bounds = array<i64: 8, 1>}, {pipeline_mode = #tpu.pipeline_mode<synchronous>, transform_indices = @transform_3, window_bounds = array<i64: 8, 144>}, {pipeline_mode = #tpu.pipeline_mode<synchronous>, transform_indices = @transform_4, window_bounds = array<i64: 8, 1>}, {transform_indices = @transform_5, window_bounds = array<i64: 1, 8, 256>}]} {
    %c0 = arith.constant 0 : index
    %c0_0 = arith.constant 0 : index
    %c0_1 = arith.constant 0 : index
    %0 = vector.load %arg1[%c0, %c0_0, %c0_1] : memref<1x8x256xbf16, #tpu.memory_space<vmem>>, vector<1x8x256xbf16>
    %1 = vector.shape_cast %0 : vector<1x8x256xbf16> to vector<8x256xbf16>
    %2 = arith.extf %1 : vector<8x256xbf16> to vector<8x256xf32>
    %3 = tpu.iota {dimensions = array<i32: 1>} : vector<1x256xi32>
    %c16_i32 = arith.constant 16 : i32
    %c0_i32 = arith.constant 0 : i32
    %4 = arith.cmpi eq, %c16_i32, %c0_i32 : i32
    %c1_i32 = arith.constant 1 : i32
    %5 = arith.select %4, %c1_i32, %c16_i32 : i32
    %6 = vector.broadcast %5 : i32 to vector<1x256xi32>
    %7 = arith.remsi %3, %6 : vector<1x256xi32>
    %c0_i32_2 = arith.constant 0 : i32
    %8 = vector.broadcast %c0_i32_2 : i32 to vector<1x256xi32>
    %9 = arith.cmpi ne, %7, %8 : vector<1x256xi32>
    %c0_i32_3 = arith.constant 0 : i32
    %10 = vector.broadcast %c0_i32_3 : i32 to vector<1x256xi32>
    %11 = arith.cmpi slt, %7, %10 : vector<1x256xi32>
    %c0_i32_4 = arith.constant 0 : i32
    %12 = arith.cmpi slt, %5, %c0_i32_4 : i32
    %13 = vector.broadcast %12 : i1 to vector<1x256xi1>
    %14 = vector.broadcast %13 : vector<1x256xi1> to vector<1x256xi1>
    %15 = arith.xori %11, %14 : vector<1x256xi1>
    %16 = arith.andi %15, %9 : vector<1x256xi1>
    %17 = vector.broadcast %5 : i32 to vector<1x256xi32>
    %18 = arith.addi %7, %17 : vector<1x256xi32>
    %19 = arith.select %16, %18, %7 : vector<1x256xi1>, vector<1x256xi32>
    %cst = arith.constant 0.000000e+00 : f32
    %20 = vector.broadcast %cst : f32 to vector<8x128xf32>
    %21 = tpu.concatenate %20, %2, %20 in 1 : vector<8x128xf32>, vector<8x256xf32>, vector<8x128xf32> -> vector<8x512xf32>
    %c0_5 = arith.constant 0 : index
    %c0_6 = arith.constant 0 : index
    %22 = vector.load %arg2[%c0_5, %c0_6] : memref<8x72xf32, #tpu.memory_space<vmem>>, vector<8x72xf32>
    %23 = vector.extract_strided_slice %21 {offsets = [0, 111], sizes = [8, 256], strides = [1, 1]} : vector<8x512xf32> to vector<8x256xf32>
    %c0_i32_7 = arith.constant 0 : i32
    %24 = vector.broadcast %c0_i32_7 : i32 to vector<1x256xi32>
    %25 = arith.cmpi sgt, %19, %24 : vector<1x256xi32>
    %cst_8 = arith.constant 0.000000e+00 : f32
    %26 = vector.shape_cast %25 : vector<1x256xi1> to vector<1x256xi1>
    %27 = vector.broadcast %26 : vector<1x256xi1> to vector<8x256xi1>
    %28 = vector.broadcast %cst_8 : f32 to vector<8x256xf32>
    %29 = arith.select %27, %23, %28 : vector<8x256xi1>, vector<8x256xf32>
    %30 = vector.extract_strided_slice %21 {offsets = [0, 112], sizes = [8, 256], strides = [1, 1]} : vector<8x512xf32> to vector<8x256xf32>
    %31 = vector.extract_strided_slice %21 {offsets = [0, 113], sizes = [8, 256], strides = [1, 1]} : vector<8x512xf32> to vector<8x256xf32>
    %c15_i32 = arith.constant 15 : i32
    %32 = vector.broadcast %c15_i32 : i32 to vector<1x256xi32>
    %33 = arith.cmpi slt, %19, %32 : vector<1x256xi32>
    %cst_9 = arith.constant 0.000000e+00 : f32
    %34 = vector.shape_cast %33 : vector<1x256xi1> to vector<1x256xi1>
    %35 = vector.broadcast %34 : vector<1x256xi1> to vector<8x256xi1>
    %36 = vector.broadcast %cst_9 : f32 to vector<8x256xf32>
    %37 = arith.select %35, %31, %36 : vector<8x256xi1>, vector<8x256xf32>
    %38 = vector.extract_strided_slice %21 {offsets = [0, 127], sizes = [8, 256], strides = [1, 1]} : vector<8x512xf32> to vector<8x256xf32>
    %c0_i32_10 = arith.constant 0 : i32
    %39 = vector.broadcast %c0_i32_10 : i32 to vector<1x256xi32>
    %40 = arith.cmpi sgt, %19, %39 : vector<1x256xi32>
    %cst_11 = arith.constant 0.000000e+00 : f32
    %41 = vector.shape_cast %40 : vector<1x256xi1> to vector<1x256xi1>
    %42 = vector.broadcast %41 : vector<1x256xi1> to vector<8x256xi1>
    %43 = vector.broadcast %cst_11 : f32 to vector<8x256xf32>
    %44 = arith.select %42, %38, %43 : vector<8x256xi1>, vector<8x256xf32>
    %45 = vector.extract_strided_slice %21 {offsets = [0, 128], sizes = [8, 256], strides = [1, 1]} : vector<8x512xf32> to vector<8x256xf32>
    %46 = vector.extract_strided_slice %21 {offsets = [0, 129], sizes = [8, 256], strides = [1, 1]} : vector<8x512xf32> to vector<8x256xf32>
    %c15_i32_12 = arith.constant 15 : i32
    %47 = vector.broadcast %c15_i32_12 : i32 to vector<1x256xi32>
    %48 = arith.cmpi slt, %19, %47 : vector<1x256xi32>
    %cst_13 = arith.constant 0.000000e+00 : f32
    %49 = vector.shape_cast %48 : vector<1x256xi1> to vector<1x256xi1>
    %50 = vector.broadcast %49 : vector<1x256xi1> to vector<8x256xi1>
    %51 = vector.broadcast %cst_13 : f32 to vector<8x256xf32>
    %52 = arith.select %50, %46, %51 : vector<8x256xi1>, vector<8x256xf32>
    %53 = vector.extract_strided_slice %21 {offsets = [0, 143], sizes = [8, 256], strides = [1, 1]} : vector<8x512xf32> to vector<8x256xf32>
    %c0_i32_14 = arith.constant 0 : i32
    %54 = vector.broadcast %c0_i32_14 : i32 to vector<1x256xi32>
    %55 = arith.cmpi sgt, %19, %54 : vector<1x256xi32>
    %cst_15 = arith.constant 0.000000e+00 : f32
    %56 = vector.shape_cast %55 : vector<1x256xi1> to vector<1x256xi1>
    %57 = vector.broadcast %56 : vector<1x256xi1> to vector<8x256xi1>
    %58 = vector.broadcast %cst_15 : f32 to vector<8x256xf32>
    %59 = arith.select %57, %53, %58 : vector<8x256xi1>, vector<8x256xf32>
    %60 = vector.extract_strided_slice %21 {offsets = [0, 144], sizes = [8, 256], strides = [1, 1]} : vector<8x512xf32> to vector<8x256xf32>
    %61 = vector.extract_strided_slice %21 {offsets = [0, 145], sizes = [8, 256], strides = [1, 1]} : vector<8x512xf32> to vector<8x256xf32>
    %c15_i32_16 = arith.constant 15 : i32
    %62 = vector.broadcast %c15_i32_16 : i32 to vector<1x256xi32>
    %63 = arith.cmpi slt, %19, %62 : vector<1x256xi32>
    %cst_17 = arith.constant 0.000000e+00 : f32
    %64 = vector.shape_cast %63 : vector<1x256xi1> to vector<1x256xi1>
    %65 = vector.broadcast %64 : vector<1x256xi1> to vector<8x256xi1>
    %66 = vector.broadcast %cst_17 : f32 to vector<8x256xf32>
    %67 = arith.select %65, %61, %66 : vector<8x256xi1>, vector<8x256xf32>
    %68 = tpu.concatenate %29, %30, %37, %44, %45, %52, %59, %60, %67 in 0 : vector<8x256xf32>, vector<8x256xf32>, vector<8x256xf32>, vector<8x256xf32>, vector<8x256xf32>, vector<8x256xf32>, vector<8x256xf32>, vector<8x256xf32>, vector<8x256xf32> -> vector<72x256xf32>
    %cst_18 = arith.constant dense<0.000000e+00> : vector<8x256xf32>
    %69 = tpu.matmul %22, %68, %cst_18 {dimension_numbers = #tpu.dot_dimension_numbers<[1], [0], [0], [1], [0, 0, 1, 1], [], []>} : vector<8x72xf32>, vector<72x256xf32>, vector<8x256xf32> -> vector<8x256xf32>
    %c0_19 = arith.constant 0 : index
    %c0_20 = arith.constant 0 : index
    %70 = vector.load %arg3[%c0_19, %c0_20] : memref<8x1xf32, #tpu.memory_space<vmem>>, vector<8x1xf32>
    %71 = vector.broadcast %70 : vector<8x1xf32> to vector<8x256xf32>
    %72 = arith.addf %69, %71 : vector<8x256xf32>
    %cst_21 = arith.constant 0.000000e+00 : f32
    %73 = vector.broadcast %cst_21 : f32 to vector<8x256xf32>
    %74 = arith.maximumf %72, %73 : vector<8x256xf32>
    %cst_22 = arith.constant 0.000000e+00 : f32
    %75 = vector.broadcast %cst_22 : f32 to vector<8x128xf32>
    %76 = tpu.concatenate %75, %74, %75 in 1 : vector<8x128xf32>, vector<8x256xf32>, vector<8x128xf32> -> vector<8x512xf32>
    %77 = tpu.concatenate %76, %21 in 0 : vector<8x512xf32>, vector<8x512xf32> -> vector<16x512xf32>
    %78 = vector.extract_strided_slice %77 {offsets = [0, 111], sizes = [16, 256], strides = [1, 1]} : vector<16x512xf32> to vector<16x256xf32>
    %c0_i32_23 = arith.constant 0 : i32
    %79 = vector.broadcast %c0_i32_23 : i32 to vector<1x256xi32>
    %80 = arith.cmpi sgt, %19, %79 : vector<1x256xi32>
    %cst_24 = arith.constant 0.000000e+00 : f32
    %81 = vector.shape_cast %80 : vector<1x256xi1> to vector<1x256xi1>
    %82 = vector.broadcast %81 : vector<1x256xi1> to vector<16x256xi1>
    %83 = vector.broadcast %cst_24 : f32 to vector<16x256xf32>
    %84 = arith.select %82, %78, %83 : vector<16x256xi1>, vector<16x256xf32>
    %85 = vector.extract_strided_slice %77 {offsets = [0, 112], sizes = [16, 256], strides = [1, 1]} : vector<16x512xf32> to vector<16x256xf32>
    %86 = vector.extract_strided_slice %77 {offsets = [0, 113], sizes = [16, 256], strides = [1, 1]} : vector<16x512xf32> to vector<16x256xf32>
    %c15_i32_25 = arith.constant 15 : i32
    %87 = vector.broadcast %c15_i32_25 : i32 to vector<1x256xi32>
    %88 = arith.cmpi slt, %19, %87 : vector<1x256xi32>
    %cst_26 = arith.constant 0.000000e+00 : f32
    %89 = vector.shape_cast %88 : vector<1x256xi1> to vector<1x256xi1>
    %90 = vector.broadcast %89 : vector<1x256xi1> to vector<16x256xi1>
    %91 = vector.broadcast %cst_26 : f32 to vector<16x256xf32>
    %92 = arith.select %90, %86, %91 : vector<16x256xi1>, vector<16x256xf32>
    %93 = vector.extract_strided_slice %77 {offsets = [0, 127], sizes = [16, 256], strides = [1, 1]} : vector<16x512xf32> to vector<16x256xf32>
    %c0_i32_27 = arith.constant 0 : i32
    %94 = vector.broadcast %c0_i32_27 : i32 to vector<1x256xi32>
    %95 = arith.cmpi sgt, %19, %94 : vector<1x256xi32>
    %cst_28 = arith.constant 0.000000e+00 : f32
    %96 = vector.shape_cast %95 : vector<1x256xi1> to vector<1x256xi1>
    %97 = vector.broadcast %96 : vector<1x256xi1> to vector<16x256xi1>
    %98 = vector.broadcast %cst_28 : f32 to vector<16x256xf32>
    %99 = arith.select %97, %93, %98 : vector<16x256xi1>, vector<16x256xf32>
    %100 = vector.extract_strided_slice %77 {offsets = [0, 128], sizes = [16, 256], strides = [1, 1]} : vector<16x512xf32> to vector<16x256xf32>
    %101 = vector.extract_strided_slice %77 {offsets = [0, 129], sizes = [16, 256], strides = [1, 1]} : vector<16x512xf32> to vector<16x256xf32>
    %c15_i32_29 = arith.constant 15 : i32
    %102 = vector.broadcast %c15_i32_29 : i32 to vector<1x256xi32>
    %103 = arith.cmpi slt, %19, %102 : vector<1x256xi32>
    %cst_30 = arith.constant 0.000000e+00 : f32
    %104 = vector.shape_cast %103 : vector<1x256xi1> to vector<1x256xi1>
    %105 = vector.broadcast %104 : vector<1x256xi1> to vector<16x256xi1>
    %106 = vector.broadcast %cst_30 : f32 to vector<16x256xf32>
    %107 = arith.select %105, %101, %106 : vector<16x256xi1>, vector<16x256xf32>
    %108 = vector.extract_strided_slice %77 {offsets = [0, 143], sizes = [16, 256], strides = [1, 1]} : vector<16x512xf32> to vector<16x256xf32>
    %c0_i32_31 = arith.constant 0 : i32
    %109 = vector.broadcast %c0_i32_31 : i32 to vector<1x256xi32>
    %110 = arith.cmpi sgt, %19, %109 : vector<1x256xi32>
    %cst_32 = arith.constant 0.000000e+00 : f32
    %111 = vector.shape_cast %110 : vector<1x256xi1> to vector<1x256xi1>
    %112 = vector.broadcast %111 : vector<1x256xi1> to vector<16x256xi1>
    %113 = vector.broadcast %cst_32 : f32 to vector<16x256xf32>
    %114 = arith.select %112, %108, %113 : vector<16x256xi1>, vector<16x256xf32>
    %115 = vector.extract_strided_slice %77 {offsets = [0, 144], sizes = [16, 256], strides = [1, 1]} : vector<16x512xf32> to vector<16x256xf32>
    %116 = vector.extract_strided_slice %77 {offsets = [0, 145], sizes = [16, 256], strides = [1, 1]} : vector<16x512xf32> to vector<16x256xf32>
    %c15_i32_33 = arith.constant 15 : i32
    %117 = vector.broadcast %c15_i32_33 : i32 to vector<1x256xi32>
    %118 = arith.cmpi slt, %19, %117 : vector<1x256xi32>
    %cst_34 = arith.constant 0.000000e+00 : f32
    %119 = vector.shape_cast %118 : vector<1x256xi1> to vector<1x256xi1>
    %120 = vector.broadcast %119 : vector<1x256xi1> to vector<16x256xi1>
    %121 = vector.broadcast %cst_34 : f32 to vector<16x256xf32>
    %122 = arith.select %120, %116, %121 : vector<16x256xi1>, vector<16x256xf32>
    %123 = tpu.concatenate %84, %85, %92, %99, %100, %107, %114, %115, %122 in 0 : vector<16x256xf32>, vector<16x256xf32>, vector<16x256xf32>, vector<16x256xf32>, vector<16x256xf32>, vector<16x256xf32>, vector<16x256xf32>, vector<16x256xf32>, vector<16x256xf32> -> vector<144x256xf32>
    %c0_35 = arith.constant 0 : index
    %c0_36 = arith.constant 0 : index
    %124 = vector.load %arg4[%c0_35, %c0_36] : memref<8x144xf32, #tpu.memory_space<vmem>>, vector<8x144xf32>
    %cst_37 = arith.constant dense<0.000000e+00> : vector<8x256xf32>
    %125 = tpu.matmul %124, %123, %cst_37 {dimension_numbers = #tpu.dot_dimension_numbers<[1], [0], [0], [1], [0, 0, 1, 1], [], []>} : vector<8x144xf32>, vector<144x256xf32>, vector<8x256xf32> -> vector<8x256xf32>
    %c0_38 = arith.constant 0 : index
    %c0_39 = arith.constant 0 : index
    %126 = vector.load %arg5[%c0_38, %c0_39] : memref<8x1xf32, #tpu.memory_space<vmem>>, vector<8x1xf32>
    %127 = vector.broadcast %126 : vector<8x1xf32> to vector<8x256xf32>
    %128 = arith.addf %125, %127 : vector<8x256xf32>
    %cst_40 = arith.constant 0.000000e+00 : f32
    %129 = vector.broadcast %cst_40 : f32 to vector<8x256xf32>
    %130 = arith.maximumf %128, %129 : vector<8x256xf32>
    %131 = arith.truncf %130 : vector<8x256xf32> to vector<8x256xbf16>
    %c0_41 = arith.constant 0 : index
    %c0_42 = arith.constant 0 : index
    %c0_43 = arith.constant 0 : index
    %132 = vector.load %arg6[%c0_41, %c0_42, %c0_43] : memref<1x8x256xbf16, #tpu.memory_space<vmem>>, vector<1x8x256xbf16>
    %133 = vector.shape_cast %132 : vector<1x8x256xbf16> to vector<8x256xbf16>
    %134 = vector.shape_cast %131 : vector<8x256xbf16> to vector<1x8x256xbf16>
    tpu.vector_store %arg6[%c0_41, %c0_42, %c0_43], %134 {strides = array<i32>} : memref<1x8x256xbf16, #tpu.memory_space<vmem>>, vector<1x8x256xbf16>,
    return
  }
  func.func @transform_0(%arg0: i32) -> (i32, i32, i32) {
    %c0_i32 = arith.constant 0 : i32
    %c0_i32_0 = arith.constant 0 : i32
    %c0_i32_1 = arith.constant 0 : i32
    return %arg0, %c0_i32, %c0_i32_0 : i32, i32, i32
  }
  func.func @transform_1(%arg0: i32) -> (i32, i32) {
    %c0_i32 = arith.constant 0 : i32
    %c0_i32_0 = arith.constant 0 : i32
    %c0_i32_1 = arith.constant 0 : i32
    return %c0_i32, %c0_i32_0 : i32, i32
  }
  func.func @transform_2(%arg0: i32) -> (i32, i32) {
    %c0_i32 = arith.constant 0 : i32
    %c0_i32_0 = arith.constant 0 : i32
    %c0_i32_1 = arith.constant 0 : i32
    return %c0_i32, %c0_i32_0 : i32, i32
  }
  func.func @transform_3(%arg0: i32) -> (i32, i32) {
    %c0_i32 = arith.constant 0 : i32
    %c0_i32_0 = arith.constant 0 : i32
    %c0_i32_1 = arith.constant 0 : i32
    return %c0_i32, %c0_i32_0 : i32, i32
  }
  func.func @transform_4(%arg0: i32) -> (i32, i32) {
    %c0_i32 = arith.constant 0 : i32
    %c0_i32_0 = arith.constant 0 : i32
    %c0_i32_1 = arith.constant 0 : i32
    return %c0_i32, %c0_i32_0 : i32, i32
  }
  func.func @transform_5(%arg0: i32) -> (i32, i32, i32) {
    %c0_i32 = arith.constant 0 : i32
    %c0_i32_0 = arith.constant 0 : i32
    %c0_i32_1 = arith.constant 0 : i32
    return %arg0, %c0_i32, %c0_i32_0 : i32, i32, i32
  }
}

</mosaic_0001>

<llo_original>
// kernel: _lambda_.2
$region0: #{_lambda_.2}
  #allocation0 [shape = 'u32[]', space=smem, size = 0x4, offset = 0x4, fixed_abs, tag = 'smem constant byte address 0x4 - core index']
  #allocation1 [shape = 'u32[144,128]{1,0:T(1,128)}', space=vmem, size = 0x12000, scoped, tag = 'internal scratch']
  %s0 = inlined_call_operand.vmem [shape: bf16[2,8,256], index: 0, kind: input, shape index: {}]
  %s1 = inlined_call_operand.vmem [shape: f32[8,72], index: 1, kind: input, shape index: {}]
  %s2 = inlined_call_operand.vmem [shape: f32[8,1], index: 2, kind: input, shape index: {}]
  %s3 = inlined_call_operand.vmem [shape: f32[8,144], index: 3, kind: input, shape index: {}]
  %s4 = inlined_call_operand.vmem [shape: f32[8,1], index: 4, kind: input, shape index: {}]
  %s5 = inlined_call_operand.vmem [shape: bf16[2,8,256], index: 5, kind: output, shape index: {}]
  %s6 = sld [smem:[#allocation0]]
  $region53: #{_lambda_.2} parent=0
    _
  %s8 = ssub.s32 1, %s6
  %s9 = scalar_select 0, %s8, %s6
  loop: start=0, step=1, limit=4
  $region2: #{_lambda_.2} parent=0 // loop_pre_header
    _
  $region3: #{_lambda_.2} parent=0 // loop_header
    %s11 = sphi 0, %s15
    %p12 = scmp.ge.s32.totalorder %s11, 4
    %s21 = sphi 0, %s23
    %s24 = sphi 0, %s21
    %s25 = sphi 0, %s24
    %s41 = sphi 0, %s25
    %s45 = sphi 0, %s45
    %s47 = sphi 0, %s45
    %s48 = sphi 0, %s47
    %s62 = sphi 0, %s48
    %s66 = sphi 0, %s66
    %s68 = sphi 0, %s66
    %s69 = sphi 0, %s68
    %s83 = sphi 0, %s69
    %s87 = sphi 0, %s87
    %s89 = sphi 0, %s87
    %s90 = sphi 0, %s89
    %s104 = sphi 0, %s90
    %s108 = sphi 0, %s108
    %s110 = sphi 0, %s108
    %s111 = sphi 0, %s110
    %s125 = sphi 0, %s111
    %s131 = sphi 0, %s133
    %s134 = sphi 0, %s131
    %s135 = sphi 0, %s134
    %s151 = sphi 0, %s135
  $region4: #{_lambda_.2} parent=0 // loop_header_branch
    %14 = sbr.rel (%p12) target = $region8
  $region5: #{_lambda_.2} parent=0 // loop_body
    %s16 = ssub.s32 %s11, 1
    %s17 = ssub.s32 %s11, 2
    %s18 = sadd.s32 %s11, 1
    %s19 = ssub.s32 %s11, %s18
    %p20 = scmp.eq.s32.totalorder %s19, 0
    %s22 = sadd.s32 %s21, 1
    %s23 = scalar_select %p20, %s21, %s22
    %p26 = pneg %p20
    %p27 = scmp.eq.s32.totalorder %s11, 1
    %p28 = por %p26, %p27
    %p29 = scmp.ne.s32.totalorder %s21, %s24
    %p30 = scmp.eq.s32.totalorder %s11, 0
    %p31 = por %p29, %p30
    %p32 = scmp.ne.s32.totalorder %s21, %s24
    %p33 = scmp.eq.s32.totalorder %s16, 1
    %p34 = por %p32, %p33
    %p35 = scmp.ne.s32.totalorder %s24, %s25
    %p36 = scmp.eq.s32.totalorder %s16, 0
    %p37 = por %p35, %p36
    %p38 = scmp.ne.s32.totalorder %s24, %s25
    %p39 = scmp.eq.s32.totalorder %s17, 1
    %p40 = por %p38, %p39
    %p42 = scmp.ne.s32.totalorder %s25, %s41
    %p43 = scmp.eq.s32.totalorder %s17, 0
    %p44 = por %p42, %p43
    %s46 = sadd.s32 %s45, 1
    %p49 = scmp.eq.s32.totalorder %s11, 1
    %p50 = scmp.ne.s32.totalorder %s45, %s47
    %p51 = scmp.eq.s32.totalorder %s11, 0
    %p52 = por %p50, %p51
    %p53 = scmp.ne.s32.totalorder %s45, %s47
    %p54 = scmp.eq.s32.totalorder %s16, 1
    %p55 = por %p53, %p54
    %p56 = scmp.ne.s32.totalorder %s47, %s48
    %p57 = scmp.eq.s32.totalorder %s16, 0
    %p58 = por %p56, %p57
    %p59 = scmp.ne.s32.totalorder %s47, %s48
    %p60 = scmp.eq.s32.totalorder %s17, 1
    %p61 = por %p59, %p60
    %p63 = scmp.ne.s32.totalorder %s48, %s62
    %p64 = scmp.eq.s32.totalorder %s17, 0
    %p65 = por %p63, %p64
    %s67 = sadd.s32 %s66, 1
    %p70 = scmp.eq.s32.totalorder %s11, 1
    %p71 = scmp.ne.s32.totalorder %s66, %s68
    %p72 = scmp.eq.s32.totalorder %s11, 0
    %p73 = por %p71, %p72
    %p74 = scmp.ne.s32.totalorder %s66, %s68
    %p75 = scmp.eq.s32.totalorder %s16, 1
    %p76 = por %p74, %p75
    %p77 = scmp.ne.s32.totalorder %s68, %s69
    %p78 = scmp.eq.s32.totalorder %s16, 0
    %p79 = por %p77, %p78
    %p80 = scmp.ne.s32.totalorder %s68, %s69
    %p81 = scmp.eq.s32.totalorder %s17, 1
    %p82 = por %p80, %p81
    %p84 = scmp.ne.s32.totalorder %s69, %s83
    %p85 = scmp.eq.s32.totalorder %s17, 0
    %p86 = por %p84, %p85
    %s88 = sadd.s32 %s87, 1
    %p91 = scmp.eq.s32.totalorder %s11, 1
    %p92 = scmp.ne.s32.totalorder %s87, %s89
    %p93 = scmp.eq.s32.totalorder %s11, 0
    %p94 = por %p92, %p93
    %p95 = scmp.ne.s32.totalorder %s87, %s89
    %p96 = scmp.eq.s32.totalorder %s16, 1
    %p97 = por %p95, %p96
    %p98 = scmp.ne.s32.totalorder %s89, %s90
    %p99 = scmp.eq.s32.totalorder %s16, 0
    %p100 = por %p98, %p99
    %p101 = scmp.ne.s32.totalorder %s89, %s90
    %p102 = scmp.eq.s32.totalorder %s17, 1
    %p103 = por %p101, %p102
    %p105 = scmp.ne.s32.totalorder %s90, %s104
    %p106 = scmp.eq.s32.totalorder %s17, 0
    %p107 = por %p105, %p106
    %s109 = sadd.s32 %s108, 1
    %p112 = scmp.eq.s32.totalorder %s11, 1
    %p113 = scmp.ne.s32.totalorder %s108, %s110
    %p114 = scmp.eq.s32.totalorder %s11, 0
    %p115 = por %p113, %p114
    %p116 = scmp.ne.s32.totalorder %s108, %s110
    %p117 = scmp.eq.s32.totalorder %s16, 1
    %p118 = por %p116, %p117
    %p119 = scmp.ne.s32.totalorder %s110, %s111
    %p120 = scmp.eq.s32.totalorder %s16, 0
    %p121 = por %p119, %p120
    %p122 = scmp.ne.s32.totalorder %s110, %s111
    %p123 = scmp.eq.s32.totalorder %s17, 1
    %p124 = por %p122, %p123
    %p126 = scmp.ne.s32.totalorder %s111, %s125
    %p127 = scmp.eq.s32.totalorder %s17, 0
    %p128 = por %p126, %p127
    %s129 = ssub.s32 %s11, %s18
    %p130 = scmp.eq.s32.totalorder %s129, 0
    %s132 = sadd.s32 %s131, 1
    %s133 = scalar_select %p130, %s131, %s132
    %p136 = pneg %p130
    %p137 = scmp.eq.s32.totalorder %s11, 1
    %p138 = por %p136, %p137
    %p139 = scmp.ne.s32.totalorder %s131, %s134
    %p140 = scmp.eq.s32.totalorder %s11, 0
    %p141 = por %p139, %p140
    %p142 = scmp.ne.s32.totalorder %s131, %s134
    %p143 = scmp.eq.s32.totalorder %s16, 1
    %p144 = por %p142, %p143
    %p145 = scmp.ne.s32.totalorder %s134, %s135
    %p146 = scmp.eq.s32.totalorder %s16, 0
    %p147 = por %p145, %p146
    %p148 = scmp.ne.s32.totalorder %s134, %s135
    %p149 = scmp.eq.s32.totalorder %s17, 1
    %p150 = por %p148, %p149
    %p152 = scmp.ne.s32.totalorder %s135, %s151
    %p153 = scmp.eq.s32.totalorder %s17, 0
    %p154 = por %p152, %p153
    %p155 = scmp.le.s32.totalorder 1, %s11
    %p156 = scmp.lt.s32.totalorder %s11, 3
    %p157 = pnand %p155, %p156
    %p158 = pneg %p157
    // Predicated region
    $region9: #{_lambda_.2} parent=5 // pred_check
      _
    $region10: #{_lambda_.2} parent=5 // pred_check_branch
      %160 = sbr.rel (%p157) target = $region12
    $region11: #{_lambda_.2} parent=5 // pred_region
      %s161 = ssub.s32 %s11, 1
      // Predicated region
      $region13: #{_lambda_.2} parent=11 // pred_check
        %p162 = pneg %p58
      $region14: #{_lambda_.2} parent=11 // pred_check_branch
        %164 = sbr.rel (%p162) target = $region16
      $region15: #{_lambda_.2} parent=11 // pred_region
        _
      $region16: #{_lambda_.2} parent=11 // pred_fallthru
        _
      // Predicated region
      $region17: #{_lambda_.2} parent=11 // pred_check
        %p165 = pneg %p79
      $region18: #{_lambda_.2} parent=11 // pred_check_branch
        %167 = sbr.rel (%p165) target = $region20
      $region19: #{_lambda_.2} parent=11 // pred_region
        _
      $region20: #{_lambda_.2} parent=11 // pred_fallthru
        _
      // Predicated region
      $region21: #{_lambda_.2} parent=11 // pred_check
        %p168 = pneg %p100
      $region22: #{_lambda_.2} parent=11 // pred_check_branch
        %170 = sbr.rel (%p168) target = $region24
      $region23: #{_lambda_.2} parent=11 // pred_region
        _
      $region24: #{_lambda_.2} parent=11 // pred_fallthru
        _
      // Predicated region
      $region25: #{_lambda_.2} parent=11 // pred_check
        %p171 = pneg %p121
      $region26: #{_lambda_.2} parent=11 // pred_check_branch
        %173 = sbr.rel (%p171) target = $region28
      $region27: #{_lambda_.2} parent=11 // pred_region
        _
      $region28: #{_lambda_.2} parent=11 // pred_fallthru
        _
    $region12: #{_lambda_.2} parent=5 // pred_fallthru
      _
    %p174 = scmp.lt.s32.totalorder %s11, 2
    // Predicated region
    $region29: #{_lambda_.2} parent=5 // pred_check
      %p175 = pneg %p174
    $region30: #{_lambda_.2} parent=5 // pred_check_branch
      %177 = sbr.rel (%p175) target = $region32
    $region31: #{_lambda_.2} parent=5 // pred_region
      // Predicated region
      $region33: #{_lambda_.2} parent=31 // pred_check
        %p178 = pneg %p31
      $region34: #{_lambda_.2} parent=31 // pred_check_branch
        %180 = sbr.rel (%p178) target = $region36
      $region35: #{_lambda_.2} parent=31 // pred_region
        %p181 = scmp.lt.s32.totalorder %s11, 1
        %s182 = scalar_select %p181, %s11, 1
        %s183 = smul.addr %s182, 2
        %s184 = smul.addr %s183, 4
        %s185 = scalar_lea.vmem %s0, %s184
      $region36: #{_lambda_.2} parent=31 // pred_fallthru
        _
    $region32: #{_lambda_.2} parent=5 // pred_fallthru
      _
    %p186 = scmp.le.s32.totalorder 1, %s11
    %p187 = scmp.lt.s32.totalorder %s11, 3
    %p188 = pnand %p186, %p187
    %p189 = pneg %p188
    // Predicated region
    $region37: #{_lambda_.2} parent=5 // pred_check
      _
    $region38: #{_lambda_.2} parent=5 // pred_check_branch
      %191 = sbr.rel (%p188) target = $region40
    $region39: #{_lambda_.2} parent=5 // pred_region
      %s192 = ssub.s32 %s11, 1
      %p193 = scmp.lt.s32.totalorder %s16, 1
      %s194 = scalar_select %p193, %s16, 1
      %s195 = smul.addr %s194, 2
      %s196 = smul.addr %s195, 4
      %s197 = scalar_lea.vmem %s0, %s196
      %p198 = pneg %p37
      %p199 = pneg %p34
      %p200 = pneg %p58
      %p201 = pneg %p55
      %p202 = pneg %p79
      %p203 = pneg %p76
      %p204 = pneg %p100
      %p205 = pneg %p97
      %p206 = pneg %p121
      %p207 = pneg %p118
      %p208 = pneg %p147
      %p209 = pneg %p144
      %p210 = scmp.lt.s32.totalorder %s16, 1
      %s211 = scalar_select %p210, %s16, 1
      %s212 = smul.addr %s211, 2
      %s213 = smul.addr %s212, 4
      %s214 = scalar_lea.vmem %s5, %s213
      %p215 = scmp.lt.s32.totalorder %s16, 1
      %s216 = scalar_select %p215, %s16, 1
      %s217 = smul.addr %s216, 2
      %s218 = smul.addr %s217, 4
      %s219 = scalar_lea.vmem %s0, %s218
      %p220 = scmp.lt.s32.totalorder %s16, 1
      %s221 = scalar_select %p220, %s16, 1
      %s222 = smul.addr %s221, 2
      %s223 = smul.addr %s222, 4
      %s224 = scalar_lea.vmem %s5, %s223
      %v225 = vld [vmem:[%s219] sm:$0xff]
      %v226 = vunpack.c.l.bf16 %v225
      %v227 = vunpack.c.h.bf16 %v225
      %v228 = vlaneseq
      %v229 = vand.u32 %v228, 127
      %v230 = vadd.s32 %v229, 128
      %vm231 = vcmp.lt.s32.totalorder %v229, 0
      %v232 = vsub.s32 0, %v229
      %v233 = vsel %vm231, %v232, %v229
      %v234 = vshrl.u32 %v233, 4
      %v235 = vand.u32 %v233, 15
      %v236 = vsub.s32 0, %v235
      %v237 = vsel %vm231, %v236, %v235
      %vm238 = vcmp.lt.s32.totalorder %v230, 0
      %v239 = vsub.s32 0, %v230
      %v240 = vsel %vm238, %v239, %v230
      %v241 = vshrl.u32 %v240, 4
      %v242 = vand.u32 %v240, 15
      %v243 = vsub.s32 0, %v242
      %v244 = vsel %vm238, %v243, %v242
      %vm245 = vcmp.ne.s32.totalorder %v237, 0
      %vm246 = vcmp.ne.s32.totalorder %v244, 0
      %vm247 = vcmp.lt.s32.totalorder %v237, 0
      %vm248 = vcmp.lt.s32.totalorder %v244, 0
      %vm249 = vmand %vm247, %vm245
      %vm250 = vmand %vm248, %vm246
      %v251 = vadd.s32 %v237, 16
      %v252 = vadd.s32 %v244, 16
      %v253 = vsel %vm249, %v251, %v237
      %v254 = vsel %vm250, %v252, %v244
      %v255 = vld [vmem:[%s1] sm:$0xff]
      %vm256 = vcmp.gt.s32.totalorder %v253, 0
      %vm257 = vcmp.gt.s32.totalorder %v254, 0
      %v258 = vsel %vm256, 1, 0
      %v259 = vsel %vm257, 1, 0
      %vm260 = vcmp.eq.s32.totalorder %v258, 1
      %vm261 = vcmp.eq.s32.totalorder %v259, 1
      %265 = vrot.lane.b32.xlu0 0.0, 17
      %v266 = vpop.permute.xlu0 %265
      %267 = vrot.lane.b32.xlu0 %v226, 17
      %v268 = vpop.permute.xlu0 %267
      %269 = vrot.lane.b32.xlu0 %v227, 17
      %v270 = vpop.permute.xlu0 %269
      %vm271 = vcmask 138240
      %v272 = vsel %vm271, %v266, %v268
      %v273 = vsel %vm271, %v268, %v270
      %v276 = vsel %vm260, %v272, 0.0
      %v277 = vsel %vm261, %v273, 0.0
      %vm278 = vcmp.lt.s32.totalorder %v253, 15
      %vm279 = vcmp.lt.s32.totalorder %v254, 15
      %v280 = vsel %vm278, 1, 0
      %v281 = vsel %vm279, 1, 0
      %vm282 = vcmp.eq.s32.totalorder %v280, 1
      %vm283 = vcmp.eq.s32.totalorder %v281, 1
      %284 = vrot.lane.b32.xlu0 0.0, 15
      %v285 = vpop.permute.xlu0 %284
      %286 = vrot.lane.b32.xlu0 %v226, 15
      %v287 = vpop.permute.xlu0 %286
      %288 = vrot.lane.b32.xlu0 %v227, 15
      %v289 = vpop.permute.xlu0 %288
      %vm290 = vcmask 121856
      %v291 = vsel %vm290, %v285, %v287
      %v292 = vsel %vm290, %v287, %v289
      %v295 = vsel %vm282, %v291, 0.0
      %v296 = vsel %vm283, %v292, 0.0
      %297 = vrot.lane.b32.xlu0 0.0, 1
      %v298 = vpop.permute.xlu0 %297
      %299 = vrot.lane.b32.xlu0 %v226, 1
      %v300 = vpop.permute.xlu0 %299
      %301 = vrot.lane.b32.xlu0 %v227, 1
      %v302 = vpop.permute.xlu0 %301
      %vm303 = vcmask 7168
      %v304 = vsel %vm303, %v298, %v300
      %v305 = vsel %vm303, %v300, %v302
      %v308 = vsel %vm260, %v304, 0.0
      %v309 = vsel %vm261, %v305, 0.0
      %310 = vrot.lane.b32.xlu0 %v226, 127
      %v311 = vpop.permute.xlu0 %310
      %312 = vrot.lane.b32.xlu0 %v227, 127
      %v313 = vpop.permute.xlu0 %312
      %314 = vrot.lane.b32.xlu0 0.0, 127
      %v315 = vpop.permute.xlu0 %314
      %vm316 = vcmask 1039360
      %v317 = vsel %vm316, %v311, %v313
      %v318 = vsel %vm316, %v313, %v315
      %v321 = vsel %vm282, %v317, 0.0
      %v322 = vsel %vm283, %v318, 0.0
      %323 = vrot.lane.b32.xlu0 %v226, 113
      %v324 = vpop.permute.xlu0 %323
      %325 = vrot.lane.b32.xlu0 %v227, 113
      %v326 = vpop.permute.xlu0 %325
      %327 = vrot.lane.b32.xlu0 0.0, 113
      %v328 = vpop.permute.xlu0 %327
      %vm329 = vcmask 924672
      %v330 = vsel %vm329, %v324, %v326
      %v331 = vsel %vm329, %v326, %v328
      %v334 = vsel %vm260, %v330, 0.0
      %v335 = vsel %vm261, %v331, 0.0
      %336 = vrot.lane.b32.xlu0 %v226, 111
      %v337 = vpop.permute.xlu0 %336
      %338 = vrot.lane.b32.xlu0 %v227, 111
      %v339 = vpop.permute.xlu0 %338
      %340 = vrot.lane.b32.xlu0 0.0, 111
      %v341 = vpop.permute.xlu0 %340
      %vm342 = vcmask 908288
      %v343 = vsel %vm342, %v337, %v339
      %v344 = vsel %vm342, %v339, %v341
      %v347 = vsel %vm282, %v343, 0.0
      %v348 = vsel %vm283, %v344, 0.0
      %349 = vrot.lane.b32.xlu0 0.0, 16
      %v350 = vpop.permute.xlu0 %349
      %351 = vrot.lane.b32.xlu0 %v226, 16
      %v352 = vpop.permute.xlu0 %351
      %353 = vrot.lane.b32.xlu0 %v227, 16
      %v354 = vpop.permute.xlu0 %353
      %vm355 = vcmask 130048
      %v356 = vsel %vm355, %v350, %v352
      %v357 = vsel %vm355, %v352, %v354
      %360 = vrot.lane.b32.xlu0 %v226, 112
      %v361 = vpop.permute.xlu0 %360
      %362 = vrot.lane.b32.xlu0 %v227, 112
      %v363 = vpop.permute.xlu0 %362
      %364 = vrot.lane.b32.xlu0 0.0, 112
      %v365 = vpop.permute.xlu0 %364
      %vm366 = vcmask 916480
      %v367 = vsel %vm366, %v361, %v363
      %v368 = vsel %vm366, %v363, %v365
      %v371 = vld [vmem:[%s2] sm:$0xff]
      %373 = vset.pattern.permute.xlu0 0
      %374 = vperm.xlu0 %373, %v371
      %v375 = vpop.permute.xlu0 %374
      %vm377 = vcmask 588800
      %v379 = vsel %vm377, %v255, 0
      %381 = vmatprep.subr.mxu0 %v277
      %382 = vmatpush1.msra.mxu0 %v276
      %383 = vmatprep.subr.mxu0 %v357
      %384 = vmatpush1.msra.mxu0 %v356
      %385 = vmatprep.subr.mxu0 %v296
      %386 = vmatpush1.msra.mxu0 %v295
      %387 = vmatprep.subr.mxu0 %v309
      %388 = vmatpush1.msra.mxu0 %v308
      %389 = vmatprep.subr.mxu0 %v227
      %390 = vmatpush1.msra.mxu0 %v226
      %391 = vmatprep.subr.mxu0 %v322
      %392 = vmatpush1.msra.mxu0 %v321
      %393 = vmatprep.subr.mxu0 %v335
      %394 = vmatpush1.msra.mxu0 %v334
      %395 = vmatprep.subr.mxu0 %v368
      %396 = vmatpush1.msra.mxu0 %v367
      %397 = vmatprep.subr.mxu0 %v348
      %398 = vmatpush1.msra.mxu0 %v347
      %399 = vmatprep.subr.mxu0 0.0
      %400 = vmatpush1.msra.mxu0 0.0
      %401 = vmatprep.subr.mxu0 0.0
      %402 = vmatpush1.msra.mxu0 0.0
      %403 = vmatprep.subr.mxu0 0.0
      %404 = vmatpush1.msra.mxu0 0.0
      %405 = vmatprep.subr.mxu0 0.0
      %406 = vmatpush1.msra.mxu0 0.0
      %407 = vmatprep.subr.mxu0 0.0
      %408 = vmatpush1.msra.mxu0 0.0
      %409 = vmatprep.subr.mxu0 0.0
      %410 = vmatpush1.msra.mxu0 0.0
      %411 = vmatprep.subr.mxu0 0.0
      %412 = vmatpush1.msra.mxu0 0.0
      %413 = vmatprep.subr.mxu0 0.0
      %414 = vmatpush1.msra.mxu0 0.0
      %415 = vmatprep.subr.mxu0 0.0
      %416 = vmatpush1.msra.mxu0 0.0
      %417 = vmatprep.subr.mxu0 0.0
      %418 = vmatpush1.msra.mxu0 0.0
      %419 = vmatprep.subr.mxu0 0.0
      %420 = vmatpush1.msra.mxu0 0.0
      %421 = vmatprep.subr.mxu0 0.0
      %422 = vmatpush1.msra.mxu0 0.0
      %423 = vmatprep.subr.mxu0 0.0
      %424 = vmatpush1.msra.mxu0 0.0
      %425 = vmatprep.subr.mxu0 0.0
      %426 = vmatpush1.msra.mxu0 0.0
      %427 = vmatprep.subr.mxu0 0.0
      %428 = vmatpush1.msra.mxu0 0.0
      %429 = vmatprep.subr.mxu0 0.0
      %430 = vmatpush1.msra.mxu0 0.0
      %431 = vmatprep.subr.mxu0 0.0
      %432 = vmatpush1.msra.mxu0 0.0
      %433 = vmatprep.subr.mxu0 0.0
      %434 = vmatpush1.msra.mxu0 0.0
      %435 = vmatprep.subr.mxu0 0.0
      %436 = vmatpush1.msra.mxu0 0.0
      %437 = vmatprep.subr.mxu0 0.0
      %438 = vmatpush1.msra.mxu0 0.0
      %439 = vmatprep.subr.mxu0 0.0
      %440 = vmatpush1.msra.mxu0 0.0
      %441 = vmatprep.subr.mxu0 0.0
      %442 = vmatpush1.msra.mxu0 0.0
      %443 = vmatprep.subr.mxu0 0.0
      %444 = vmatpush1.msra.mxu0 0.0
      %445 = vmatprep.mubr.f32.mxu0 0.0
      %446 = vmatmul.mubr.f32.gmra.mrb[0].mxu0 %v379
      %v447 = vpop.f32.mrb[0].mxu0
      %v448 = vadd.f32 %v375, %v447
      %v449 = vpop.f32.mrb[0].mxu0
      %v450 = vadd.f32 %v375, %v449
      %451 = vdwg.mxu0
      %v452 = vmax.f32 %v448, 0.0
      %v453 = vmax.f32 %v450, 0.0
      %456 = vrot.lane.b32.xlu0 %v452, 17
      %v457 = vpop.permute.xlu0 %456
      %458 = vrot.lane.b32.xlu0 %v453, 17
      %v459 = vpop.permute.xlu0 %458
      %v460 = vsel %vm271, %v266, %v457
      %v461 = vsel %vm271, %v457, %v459
      %v464 = vsel %vm260, %v460, 0.0
      %v465 = vsel %vm261, %v461, 0.0
      %466 = vrot.lane.b32.xlu0 %v452, 15
      %v467 = vpop.permute.xlu0 %466
      %468 = vrot.lane.b32.xlu0 %v453, 15
      %v469 = vpop.permute.xlu0 %468
      %v470 = vsel %vm290, %v285, %v467
      %v471 = vsel %vm290, %v467, %v469
      %v474 = vsel %vm282, %v470, 0.0
      %v475 = vsel %vm283, %v471, 0.0
      %476 = vrot.lane.b32.xlu0 %v452, 1
      %v477 = vpop.permute.xlu0 %476
      %478 = vrot.lane.b32.xlu0 %v453, 1
      %v479 = vpop.permute.xlu0 %478
      %v480 = vsel %vm303, %v298, %v477
      %v481 = vsel %vm303, %v477, %v479
      %v484 = vsel %vm260, %v480, 0.0
      %v485 = vsel %vm261, %v481, 0.0
      %486 = vrot.lane.b32.xlu0 %v452, 127
      %v487 = vpop.permute.xlu0 %486
      %488 = vrot.lane.b32.xlu0 %v453, 127
      %v489 = vpop.permute.xlu0 %488
      %v490 = vsel %vm316, %v487, %v489
      %v491 = vsel %vm316, %v489, %v315
      %v494 = vsel %vm282, %v490, 0.0
      %v495 = vsel %vm283, %v491, 0.0
      %496 = vrot.lane.b32.xlu0 %v452, 113
      %v497 = vpop.permute.xlu0 %496
      %498 = vrot.lane.b32.xlu0 %v453, 113
      %v499 = vpop.permute.xlu0 %498
      %v500 = vsel %vm329, %v497, %v499
      %v501 = vsel %vm329, %v499, %v328
      %v504 = vsel %vm260, %v500, 0.0
      %v505 = vsel %vm261, %v501, 0.0
      %506 = vrot.lane.b32.xlu0 %v452, 111
      %v507 = vpop.permute.xlu0 %506
      %508 = vrot.lane.b32.xlu0 %v453, 111
      %v509 = vpop.permute.xlu0 %508
      %v510 = vsel %vm342, %v507, %v509
      %v511 = vsel %vm342, %v509, %v341
      %v514 = vsel %vm282, %v510, 0.0
      %v515 = vsel %vm283, %v511, 0.0
      %516 = vrot.lane.b32.xlu0 %v452, 16
      %v517 = vpop.permute.xlu0 %516
      %518 = vrot.lane.b32.xlu0 %v453, 16
      %v519 = vpop.permute.xlu0 %518
      %v520 = vsel %vm355, %v350, %v517
      %v521 = vsel %vm355, %v517, %v519
      %524 = vrot.lane.b32.xlu0 %v452, 112
      %v525 = vpop.permute.xlu0 %524
      %526 = vrot.lane.b32.xlu0 %v453, 112
      %v527 = vpop.permute.xlu0 %526
      %v528 = vsel %vm366, %v525, %v527
      %v529 = vsel %vm366, %v527, %v365
      %v532 = vld [vmem:[%s3] sm:$0xff]
      %v533 = vld [vmem:[%s3 + $0x8] sm:$0xff]
      %v534 = vld [vmem:[%s4] sm:$0xff]
      %536 = vset.pattern.permute.xlu0 0
      %537 = vperm.xlu0 %536, %v534
      %v538 = vpop.permute.xlu0 %537
      %v541 = vsel %vm355, %v533, 0
      %543 = vmatprep.subr.mxu0 %v465
      %544 = vmatpush1.msra.mxu0 %v464
      %545 = vmatprep.subr.mxu0 %v277
      %546 = vmatpush1.msra.mxu0 %v276
      %547 = vmatprep.subr.mxu0 %v521
      %548 = vmatpush1.msra.mxu0 %v520
      %549 = vmatprep.subr.mxu0 %v357
      %550 = vmatpush1.msra.mxu0 %v356
      %551 = vmatprep.subr.mxu0 %v475
      %552 = vmatpush1.msra.mxu0 %v474
      %553 = vmatprep.subr.mxu0 %v296
      %554 = vmatpush1.msra.mxu0 %v295
      %555 = vmatprep.subr.mxu0 %v485
      %556 = vmatpush1.msra.mxu0 %v484
      %557 = vmatprep.subr.mxu0 %v309
      %558 = vmatpush1.msra.mxu0 %v308
      %559 = vmatprep.subr.mxu0 %v453
      %560 = vmatpush1.msra.mxu0 %v452
      %561 = vmatprep.subr.mxu0 %v227
      %562 = vmatpush1.msra.mxu0 %v226
      %563 = vmatprep.subr.mxu0 %v495
      %564 = vmatpush1.msra.mxu0 %v494
      %565 = vmatprep.subr.mxu0 %v322
      %566 = vmatpush1.msra.mxu0 %v321
      %567 = vmatprep.subr.mxu0 %v505
      %568 = vmatpush1.msra.mxu0 %v504
      %569 = vmatprep.subr.mxu0 %v335
      %570 = vmatpush1.msra.mxu0 %v334
      %571 = vmatprep.subr.mxu0 %v529
      %572 = vmatpush1.msra.mxu0 %v528
      %573 = vmatprep.subr.mxu0 %v368
      %574 = vmatpush1.msra.mxu0 %v367
      %575 = vmatprep.subr.mxu0 %v515
      %576 = vmatpush1.msra.mxu0 %v514
      %577 = vmatprep.subr.mxu0 %v348
      %578 = vmatpush1.msra.mxu0 %v347
      %579 = vmatprep.subr.mxu0 0.0
      %580 = vmatpush1.msra.mxu0 0.0
      %581 = vmatprep.subr.mxu0 0.0
      %582 = vmatpush1.msra.mxu0 0.0
      %583 = vmatprep.subr.mxu0 0.0
      %584 = vmatpush1.msra.mxu0 0.0
      %585 = vmatprep.subr.mxu0 0.0
      %586 = vmatpush1.msra.mxu0 0.0
      %587 = vmatprep.subr.mxu0 0.0
      %588 = vmatpush1.msra.mxu0 0.0
      %589 = vmatprep.subr.mxu0 0.0
      %590 = vmatpush1.msra.mxu0 0.0
      %591 = vmatprep.subr.mxu0 0.0
      %592 = vmatpush1.msra.mxu0 0.0
      %593 = vmatprep.subr.mxu0 0.0
      %594 = vmatpush1.msra.mxu0 0.0
      %595 = vmatprep.subr.mxu0 0.0
      %596 = vmatpush1.msra.mxu0 0.0
      %597 = vmatprep.subr.mxu0 0.0
      %598 = vmatpush1.msra.mxu0 0.0
      %599 = vmatprep.subr.mxu0 0.0
      %600 = vmatpush1.msra.mxu0 0.0
      %601 = vmatprep.subr.mxu0 0.0
      %602 = vmatpush1.msra.mxu0 0.0
      %603 = vmatprep.subr.mxu0 0.0
      %604 = vmatpush1.msra.mxu0 0.0
      %605 = vmatprep.subr.mxu0 0.0
      %606 = vmatpush1.msra.mxu0 0.0
      %607 = vmatprep.mubr.f32.mxu0 %v541
      %608 = vmatmul.mubr.f32.gmra.mrb[0].mxu0 %v532
      %v609 = vpop.f32.mrb[0].mxu0
      %v610 = vadd.f32 %v538, %v609
      %v611 = vpop.f32.mrb[0].mxu0
      %v612 = vadd.f32 %v538, %v611
      %613 = vdwg.mxu0
      %v614 = vmax.f32 %v610, 0.0
      %v615 = vmax.f32 %v612, 0.0
      %v616 = vpack.c.bf16 %v614, %v614
      %v617 = vpack.c.bf16 %v615, %v615
      %v620 = vunpack.c.l.b16 %v616
      %v621 = vunpack.c.l.b16 %v617
      %v622 = vpack.c.b16 %v621, %v620
      %624 = vst [vmem:[%s224] sm:$0xff] %v622
      %p625 = scmp.lt.s32.totalorder %s16, 1
      %s626 = scalar_select %p625, %s16, 1
      %s627 = smul.addr %s626, 2
      %s628 = smul.addr %s627, 4
      %s629 = scalar_lea.vmem %s5, %s628
      // Predicated region
      $region41: #{_lambda_.2} parent=39 // pred_check
        %p630 = pneg %p144
      $region42: #{_lambda_.2} parent=39 // pred_check_branch
        %632 = sbr.rel (%p630) target = $region44
      $region43: #{_lambda_.2} parent=39 // pred_region
        _
      $region44: #{_lambda_.2} parent=39 // pred_fallthru
        _
    $region40: #{_lambda_.2} parent=5 // pred_fallthru
      _
    %p633 = scmp.le.s32.totalorder 2, %s11
    // Predicated region
    $region45: #{_lambda_.2} parent=5 // pred_check
      %p634 = pneg %p633
    $region46: #{_lambda_.2} parent=5 // pred_check_branch
      %636 = sbr.rel (%p634) target = $region48
    $region47: #{_lambda_.2} parent=5 // pred_region
      %s637 = ssub.s32 %s11, 2
      // Predicated region
      $region49: #{_lambda_.2} parent=47 // pred_check
        %p638 = pneg %p150
      $region50: #{_lambda_.2} parent=47 // pred_check_branch
        %640 = sbr.rel (%p638) target = $region52
      $region51: #{_lambda_.2} parent=47 // pred_region
        %p641 = scmp.lt.s32.totalorder %s17, 1
        %s642 = scalar_select %p641, %s17, 1
        %s643 = smul.addr %s642, 2
        %s644 = smul.addr %s643, 4
        %s645 = scalar_lea.vmem %s5, %s644
      $region52: #{_lambda_.2} parent=47 // pred_fallthru
        _
    $region48: #{_lambda_.2} parent=5 // pred_fallthru
      _
  $region6: #{_lambda_.2} parent=0 // loop_footer
    %s15 = sadd.s32 1, %s11
  $region7: #{_lambda_.2} parent=0 // loop_footer_branch
    %10 = sbr.rel target = $region3
  $region8: #{_lambda_.2} parent=0 // loop_exit
    _

</llo_original>
